<compile_context>
chip_gen: v6e
topology: v6e:2x2x1
jax: 0.10.0
libtpu: 0.0.40
codegen_flags: <defaults>
</compile_context>

<pallas_src>
import functools

import jax
import jax.numpy as jnp
from jax.experimental import pallas as pl
from jax.experimental.pallas import tpu as pltpu


def _cdiv(a, b):
    return -(-a // b)


def _conv1x1_kernel(x_ref, w_ref, b_ref, o_ref):
    # x_ref: (1, Cin, TL)   w_ref: (TCout, Cin)   b_ref: (TCout, 1) f32
    # o_ref: (1, TCout, TL)
    acc = jnp.dot(w_ref[...], x_ref[0], preferred_element_type=jnp.float32)
    acc = acc + b_ref[...]                       # broadcast (TCout,1) over lanes
    o_ref[0] = jnp.maximum(acc, 0.0).astype(o_ref.dtype)


def _plan_tiles(hw, cin, cout, in_bytes, out_bytes):
    """Generation-aware tile plan.

    Returns (spatial_tile, cout_tile, vmem_limit_bytes).
    """
    try:
        vmem_cap = int(pltpu.get_tpu_info().vmem_capacity_bytes)
    except Exception:
        vmem_cap = 64 << 20                       # conservative (v7x-sized) fallback
    # 64 MiB on v5e/v6e (128 MiB physical), 48 MiB on v7x (64 MiB physical).
    vmem_limit = min(64 << 20, (vmem_cap * 3) // 4)
    budget = (vmem_limit * 3) // 4                # working-set target with headroom

    # --- Cout tiling guard: keep the resident weight tile <= ~8 MiB ----------
    w_target = 8 << 20
    sub = 16 if in_bytes < 4 else 8               # sublane granularity (packed dtypes)
    if cout * cin * in_bytes <= w_target or cout <= sub:
        tc_out = cout
    else:
        tc_out = max(sub, (w_target // (cin * in_bytes)) // sub * sub)
        tc_out = min(tc_out, cout)
    # TODO(synk): add a Cin ("arbitrary") reduction axis with a VMEM f32
    # accumulator for extremely large Cin where even one Cin stripe is too big.

    fixed = tc_out * cin * in_bytes + tc_out * 4          # resident W tile + f32 bias
    per_lane = 2 * (cin * in_bytes + tc_out * out_bytes)  # double-buffered x + out

    # Bytes-based lane cap: each x / out stream tile ~<= 4 MiB (no hard lane cap).
    stream_target = 4 << 20
    tl_cap = min((budget - fixed) // per_lane,
                 stream_target // max(cin * in_bytes, tc_out * out_bytes))
    tl_cap = max(128, (int(tl_cap) // 128) * 128)

    if hw <= tl_cap:
        return hw, tc_out, vmem_limit             # full spatial extent: always legal

    # Balance tiles so the tail block is not skinny; prefer multiples of 256.
    n_tiles = _cdiv(hw, tl_cap)
    tl = _cdiv(_cdiv(hw, n_tiles), 128) * 128
    if tl % 256 and tl + 128 <= tl_cap:
        tl += 128
    return tl, tc_out, vmem_limit


@functools.partial(jax.jit, static_argnames=("stride", "compute_dtype"))
def conv1x1_relu(x_nchw, weight, bias, stride=1, compute_dtype=None):
    """Equivalent of Conv1x1(in_ch, out_ch, stride, kernel=1).forward (conv + ReLU).

    Args:
      x_nchw:        (N, Cin, H, W) float32
      weight:        (Cout, Cin, 1, 1) float32 (PyTorch conv weight layout)
      bias:          (Cout,) float32
      stride:        1 or 2
      compute_dtype: optional reduced-precision dtype (e.g. jnp.bfloat16) for
                     the x / W streams; accumulation + epilogue stay f32.
    Returns:
      (N, Cout, H//stride, W//stride) in x's dtype.
    """
    n, cin, h, w = x_nchw.shape
    cout = weight.shape[0]
    out_dtype = x_nchw.dtype

    # For a kernel=1 / pad=0 conv, stride == pure spatial subsampling.
    # TODO(synk): fold stride=2 into the kernel (even-row BlockSpec index_map +
    # in-kernel column selection) to remove this extra HBM pass on the
    # stride-2 path; the wrapper slice is kept here for robustness.
    if stride != 1:
        x_nchw = x_nchw[:, :, ::stride, ::stride]
    h_out, w_out = x_nchw.shape[2], x_nchw.shape[3]
    hw = h_out * w_out

    # Free, contiguous reshapes -- stay NCHW-native, no transposes.
    x3 = x_nchw.reshape(n, cin, hw)               # (N, Cin, HW)
    w_mat = weight.reshape(cout, cin)             # (Cout, Cin)
    b_col = bias.reshape(cout, 1).astype(jnp.float32)

    if compute_dtype is not None:
        x3 = x3.astype(compute_dtype)
        w_mat = w_mat.astype(compute_dtype)

    in_bytes = jnp.dtype(x3.dtype).itemsize
    out_bytes = jnp.dtype(out_dtype).itemsize
    tl, tc_out, vmem_limit = _plan_tiles(hw, cin, cout, in_bytes, out_bytes)

    n_cout_tiles = _cdiv(cout, tc_out)
    grid = (n, n_cout_tiles, pl.cdiv(hw, tl))

    if n_cout_tiles == 1:
        # Constant index maps -> single-buffer the resident weight/bias to free
        # VMEM for larger spatial tiles.
        w_spec = pl.BlockSpec((tc_out, cin), lambda i, j, k: (j, 0),
                              pipeline_mode=pl.Buffered(1))
        b_spec = pl.BlockSpec((tc_out, 1), lambda i, j, k: (j, 0),
                              pipeline_mode=pl.Buffered(1))
    else:
        w_spec = pl.BlockSpec((tc_out, cin), lambda i, j, k: (j, 0))
        b_spec = pl.BlockSpec((tc_out, 1), lambda i, j, k: (j, 0))

    cost = pl.CostEstimate(
        flops=2 * n * cout * cin * hw,
        transcendentals=0,
        bytes_accessed=(n * cin * hw * in_bytes + cout * cin * in_bytes
                        + cout * 4 + n * cout * hw * out_bytes),
    )

    out3 = pl.pallas_call(
        _conv1x1_kernel,
        out_shape=jax.ShapeDtypeStruct((n, cout, hw), out_dtype),
        grid_spec=pltpu.PrefetchScalarGridSpec(
            num_scalar_prefetch=0,
            grid=grid,
            in_specs=[
                pl.BlockSpec((1, cin, tl), lambda i, j, k: (i, 0, k)),
                w_spec,
                b_spec,
            ],
            out_specs=pl.BlockSpec((1, tc_out, tl), lambda i, j, k: (i, j, k)),
        ),
        compiler_params=pltpu.CompilerParams(
            # All axes independent -> megacore / v7x 2-TC sharding may split
            # any of them (incl. the spatial axis when N == 1).
            dimension_semantics=("parallel", "parallel", "parallel"),
            vmem_limit_bytes=int(vmem_limit),
        ),
        cost_estimate=cost,
    )(x3, w_mat, b_col)

    return out3.reshape(n, cout, h_out, w_out)


if __name__ == "__main__":
    key = jax.random.PRNGKey(0)
    kx, kw, kb = jax.random.split(key, 3)

    # Small shapes consistent with the module: N=2, Cin=4, Cout=8, H=W=16.
    n, cin, cout, hw = 2, 4, 8, 16
    x = jax.random.normal(kx, (n, cin, hw, hw), dtype=jnp.float32)
    weight = jax.random.normal(kw, (cout, cin, 1, 1), dtype=jnp.float32) * 0.1
    bias = jax.random.normal(kb, (cout,), dtype=jnp.float32) * 0.1

    # Pure-JAX reference (same math, no Pallas).
    ref = jnp.einsum("nchw,oc->nohw", x, weight.reshape(cout, cin))
    ref = jnp.maximum(ref + bias.reshape(1, cout, 1, 1), 0.0)

    # stride = 1, f32
    out = jax.block_until_ready(conv1x1_relu(x, weight, bias, stride=1))
    assert out.shape == (n, cout, hw, hw)
    assert jnp.allclose(out, ref, atol=1e-5, rtol=1e-5)

    # stride = 2, f32 (for 1x1/pad-0: relu(conv(x))[::2,::2] == relu(conv(x[::2,::2])))
    out2 = jax.block_until_ready(conv1x1_relu(x, weight, bias, stride=2))
    assert out2.shape == (n, cout, hw // 2, hw // 2)
    assert jnp.allclose(out2, ref[:, :, ::2, ::2], atol=1e-5, rtol=1e-5)

    # stride = 1, optional bf16 compute path (reduced-precision tolerance).
    out_bf = jax.block_until_ready(
        conv1x1_relu(x, weight, bias, stride=1, compute_dtype=jnp.bfloat16))
    xb = x.astype(jnp.bfloat16).astype(jnp.float32)
    wb = weight.reshape(cout, cin).astype(jnp.bfloat16).astype(jnp.float32)
    ref_bf = jnp.maximum(jnp.einsum("nchw,oc->nohw", xb, wb)
                         + bias.reshape(1, cout, 1, 1), 0.0)
    assert out_bf.shape == (n, cout, hw, hw)
    assert jnp.allclose(out_bf, ref_bf, atol=1e-2, rtol=1e-2)

    print("KERNEL_OK")
</pallas_src>

<mosaic_0001>
module attributes {stable_mosaic.version = 11 : i64} {
  func.func @_conv1x1_kernel(%arg0: i32, %arg1: i32, %arg2: i32, %arg3: memref<1x4x256xf32, #tpu.memory_space<vmem>>, %arg4: memref<8x4xf32, #tpu.memory_space<vmem>>, %arg5: memref<8x1xf32, #tpu.memory_space<vmem>>, %arg6: memref<1x8x256xf32, #tpu.memory_space<vmem>>) attributes {dimension_semantics = [#tpu.dimension_semantics<parallel>, #tpu.dimension_semantics<parallel>, #tpu.dimension_semantics<parallel>], iteration_bounds = array<i64: 2, 1, 1>, scalar_prefetch = 0 : i64, scratch_operands = 0 : i64, tpu.core_type = #tpu.core_type<tc>, window_params = [{transform_indices = @transform_0, window_bounds = array<i64: 1, 4, 256>}, {pipeline_mode = #tpu.pipeline_mode<synchronous>, transform_indices = @transform_1, window_bounds = array<i64: 8, 4>}, {pipeline_mode = #tpu.pipeline_mode<synchronous>, transform_indices = @transform_2, window_bounds = array<i64: 8, 1>}, {transform_indices = @transform_3, window_bounds = array<i64: 1, 8, 256>}]} {
    %c0 = arith.constant 0 : index
    %c0_0 = arith.constant 0 : index
    %0 = vector.load %arg4[%c0, %c0_0] : memref<8x4xf32, #tpu.memory_space<vmem>>, vector<8x4xf32>
    %c0_1 = arith.constant 0 : index
    %c0_2 = arith.constant 0 : index
    %c0_3 = arith.constant 0 : index
    %1 = vector.load %arg3[%c0_1, %c0_2, %c0_3] : memref<1x4x256xf32, #tpu.memory_space<vmem>>, vector<1x4x256xf32>
    %2 = vector.shape_cast %1 : vector<1x4x256xf32> to vector<4x256xf32>
    %cst = arith.constant dense<0.000000e+00> : vector<8x256xf32>
    %3 = tpu.matmul %0, %2, %cst {dimension_numbers = #tpu.dot_dimension_numbers<[1], [0], [0], [1], [0, 0, 1, 1], [], []>} : vector<8x4xf32>, vector<4x256xf32>, vector<8x256xf32> -> vector<8x256xf32>
    %c0_4 = arith.constant 0 : index
    %c0_5 = arith.constant 0 : index
    %4 = vector.load %arg5[%c0_4, %c0_5] : memref<8x1xf32, #tpu.memory_space<vmem>>, vector<8x1xf32>
    %5 = vector.broadcast %4 : vector<8x1xf32> to vector<8x256xf32>
    %6 = arith.addf %3, %5 : vector<8x256xf32>
    %cst_6 = arith.constant 0.000000e+00 : f32
    %7 = vector.broadcast %cst_6 : f32 to vector<8x256xf32>
    %8 = arith.maximumf %6, %7 : vector<8x256xf32>
    %c0_7 = arith.constant 0 : index
    %c0_8 = arith.constant 0 : index
    %c0_9 = arith.constant 0 : index
    %9 = vector.load %arg6[%c0_7, %c0_8, %c0_9] : memref<1x8x256xf32, #tpu.memory_space<vmem>>, vector<1x8x256xf32>
    %10 = vector.shape_cast %9 : vector<1x8x256xf32> to vector<8x256xf32>
    %11 = vector.shape_cast %8 : vector<8x256xf32> to vector<1x8x256xf32>
    tpu.vector_store %arg6[%c0_7, %c0_8, %c0_9], %11 {strides = array<i32>} : memref<1x8x256xf32, #tpu.memory_space<vmem>>, vector<1x8x256xf32>,
    return
  }
  func.func @transform_0(%arg0: i32, %arg1: i32, %arg2: i32) -> (i32, i32, i32) {
    %c0_i32 = arith.constant 0 : i32
    %c0_i32_0 = arith.constant 0 : i32
    return %arg0, %c0_i32, %arg2 : i32, i32, i32
  }
  func.func @transform_1(%arg0: i32, %arg1: i32, %arg2: i32) -> (i32, i32) {
    %c0_i32 = arith.constant 0 : i32
    %c0_i32_0 = arith.constant 0 : i32
    return %arg1, %c0_i32 : i32, i32
  }
  func.func @transform_2(%arg0: i32, %arg1: i32, %arg2: i32) -> (i32, i32) {
    %c0_i32 = arith.constant 0 : i32
    %c0_i32_0 = arith.constant 0 : i32
    return %arg1, %c0_i32 : i32, i32
  }
  func.func @transform_3(%arg0: i32, %arg1: i32, %arg2: i32) -> (i32, i32, i32) {
    %c0_i32 = arith.constant 0 : i32
    return %arg0, %arg1, %arg2 : i32, i32, i32
  }
}

</mosaic_0001>

<llo_original>
// kernel: conv1x1_relu.1
$region0: #{conv1x1_relu.1}
  #allocation0 [shape = 'u32[]', space=smem, size = 0x4, offset = 0x4, fixed_abs, tag = 'smem constant byte address 0x4 - core index']
  #allocation1 [shape = 'u32[144,128]{1,0:T(1,128)}', space=vmem, size = 0x12000, scoped, tag = 'internal scratch']
  %s0 = inlined_call_operand.vmem [shape: f32[2,4,256], index: 0, kind: input, shape index: {}]
  %s1 = inlined_call_operand.vmem [shape: f32[8,4], index: 1, kind: input, shape index: {}]
  %s2 = inlined_call_operand.vmem [shape: f32[8,1], index: 2, kind: input, shape index: {}]
  %s3 = inlined_call_operand.vmem [shape: f32[2,8,256], index: 3, kind: output, shape index: {}]
  %s4 = sld [smem:[#allocation0]]
  $region45: #{conv1x1_relu.1} parent=0
    _
  %s6 = ssub.s32 1, %s4
  %s7 = scalar_select 0, %s6, %s4
  loop: start=0, step=1, limit=4
  $region2: #{conv1x1_relu.1} parent=0 // loop_pre_header
    _
  $region3: #{conv1x1_relu.1} parent=0 // loop_header
    %s9 = sphi 0, %s13
    %p10 = scmp.ge.s32.totalorder %s9, 4
    %s16 = sphi 0, %s35
    %s17 = sphi 0, %s31
    %s18 = sphi 0, %s27
    %s19 = sphi 0, %s16
    %s20 = sphi 0, %s17
    %s21 = sphi 0, %s18
    %s22 = sphi 0, %s19
    %s23 = sphi 0, %s20
    %s24 = sphi 0, %s21
    %s40 = sphi 0, %s42
    %s43 = sphi 0, %s40
    %s44 = sphi 0, %s43
    %s60 = sphi 0, %s44
    %s66 = sphi 0, %s68
    %s69 = sphi 0, %s66
    %s70 = sphi 0, %s69
    %s86 = sphi 0, %s70
    %s92 = sphi 0, %s94
    %s95 = sphi 0, %s92
    %s96 = sphi 0, %s95
    %s112 = sphi 0, %s96
    %s122 = sphi 0, %s124
    %s125 = sphi 0, %s122
    %s126 = sphi 0, %s125
    %s142 = sphi 0, %s126
  $region4: #{conv1x1_relu.1} parent=0 // loop_header_branch
    %12 = sbr.rel (%p10) target = $region8
  $region5: #{conv1x1_relu.1} parent=0 // loop_body
    %s14 = ssub.s32 %s9, 1
    %s15 = ssub.s32 %s9, 2
    %s25 = sadd.s32 1, %s18
    %p26 = scmp.ge.s32.totalorder %s25, 1
    %s27 = scalar_select %p26, 0, %s25
    %s28 = sadd.s32 1, %s17
    %s29 = scalar_select %p26, %s28, %s17
    %p30 = scmp.ge.s32.totalorder %s29, 1
    %s31 = scalar_select %p30, 0, %s29
    %s32 = sadd.s32 1, %s16
    %s33 = scalar_select %p30, %s32, %s16
    %p34 = scmp.ge.s32.totalorder %s33, 2
    %s35 = scalar_select %p34, 0, %s33
    %s36 = ssub.s32 %s16, %s35
    %s37 = ssub.s32 %s18, %s27
    %s38 = sor.u32 %s36, %s37
    %p39 = scmp.eq.s32.totalorder %s38, 0
    %s41 = sadd.s32 %s40, 1
    %s42 = scalar_select %p39, %s40, %s41
    %p45 = pneg %p39
    %p46 = scmp.eq.s32.totalorder %s9, 1
    %p47 = por %p45, %p46
    %p48 = scmp.ne.s32.totalorder %s40, %s43
    %p49 = scmp.eq.s32.totalorder %s9, 0
    %p50 = por %p48, %p49
    %p51 = scmp.ne.s32.totalorder %s40, %s43
    %p52 = scmp.eq.s32.totalorder %s14, 1
    %p53 = por %p51, %p52
    %p54 = scmp.ne.s32.totalorder %s43, %s44
    %p55 = scmp.eq.s32.totalorder %s14, 0
    %p56 = por %p54, %p55
    %p57 = scmp.ne.s32.totalorder %s43, %s44
    %p58 = scmp.eq.s32.totalorder %s15, 1
    %p59 = por %p57, %p58
    %p61 = scmp.ne.s32.totalorder %s44, %s60
    %p62 = scmp.eq.s32.totalorder %s15, 0
    %p63 = por %p61, %p62
    %s64 = ssub.s32 %s17, %s31
    %p65 = scmp.eq.s32.totalorder %s64, 0
    %s67 = sadd.s32 %s66, 1
    %s68 = scalar_select %p65, %s66, %s67
    %p71 = pneg %p65
    %p72 = scmp.eq.s32.totalorder %s9, 1
    %p73 = por %p71, %p72
    %p74 = scmp.ne.s32.totalorder %s66, %s69
    %p75 = scmp.eq.s32.totalorder %s9, 0
    %p76 = por %p74, %p75
    %p77 = scmp.ne.s32.totalorder %s66, %s69
    %p78 = scmp.eq.s32.totalorder %s14, 1
    %p79 = por %p77, %p78
    %p80 = scmp.ne.s32.totalorder %s69, %s70
    %p81 = scmp.eq.s32.totalorder %s14, 0
    %p82 = por %p80, %p81
    %p83 = scmp.ne.s32.totalorder %s69, %s70
    %p84 = scmp.eq.s32.totalorder %s15, 1
    %p85 = por %p83, %p84
    %p87 = scmp.ne.s32.totalorder %s70, %s86
    %p88 = scmp.eq.s32.totalorder %s15, 0
    %p89 = por %p87, %p88
    %s90 = ssub.s32 %s17, %s31
    %p91 = scmp.eq.s32.totalorder %s90, 0
    %s93 = sadd.s32 %s92, 1
    %s94 = scalar_select %p91, %s92, %s93
    %p97 = pneg %p91
    %p98 = scmp.eq.s32.totalorder %s9, 1
    %p99 = por %p97, %p98
    %p100 = scmp.ne.s32.totalorder %s92, %s95
    %p101 = scmp.eq.s32.totalorder %s9, 0
    %p102 = por %p100, %p101
    %p103 = scmp.ne.s32.totalorder %s92, %s95
    %p104 = scmp.eq.s32.totalorder %s14, 1
    %p105 = por %p103, %p104
    %p106 = scmp.ne.s32.totalorder %s95, %s96
    %p107 = scmp.eq.s32.totalorder %s14, 0
    %p108 = por %p106, %p107
    %p109 = scmp.ne.s32.totalorder %s95, %s96
    %p110 = scmp.eq.s32.totalorder %s15, 1
    %p111 = por %p109, %p110
    %p113 = scmp.ne.s32.totalorder %s96, %s112
    %p114 = scmp.eq.s32.totalorder %s15, 0
    %p115 = por %p113, %p114
    %s116 = ssub.s32 %s16, %s35
    %s117 = ssub.s32 %s17, %s31
    %s118 = sor.u32 %s116, %s117
    %s119 = ssub.s32 %s18, %s27
    %s120 = sor.u32 %s118, %s119
    %p121 = scmp.eq.s32.totalorder %s120, 0
    %s123 = sadd.s32 %s122, 1
    %s124 = scalar_select %p121, %s122, %s123
    %p127 = pneg %p121
    %p128 = scmp.eq.s32.totalorder %s9, 1
    %p129 = por %p127, %p128
    %p130 = scmp.ne.s32.totalorder %s122, %s125
    %p131 = scmp.eq.s32.totalorder %s9, 0
    %p132 = por %p130, %p131
    %p133 = scmp.ne.s32.totalorder %s122, %s125
    %p134 = scmp.eq.s32.totalorder %s14, 1
    %p135 = por %p133, %p134
    %p136 = scmp.ne.s32.totalorder %s125, %s126
    %p137 = scmp.eq.s32.totalorder %s14, 0
    %p138 = por %p136, %p137
    %p139 = scmp.ne.s32.totalorder %s125, %s126
    %p140 = scmp.eq.s32.totalorder %s15, 1
    %p141 = por %p139, %p140
    %p143 = scmp.ne.s32.totalorder %s126, %s142
    %p144 = scmp.eq.s32.totalorder %s15, 0
    %p145 = por %p143, %p144
    %p146 = scmp.le.s32.totalorder 1, %s9
    %p147 = scmp.lt.s32.totalorder %s9, 3
    %p148 = pnand %p146, %p147
    %p149 = pneg %p148
    // Predicated region
    $region9: #{conv1x1_relu.1} parent=5 // pred_check
      _
    $region10: #{conv1x1_relu.1} parent=5 // pred_check_branch
      %151 = sbr.rel (%p148) target = $region12
    $region11: #{conv1x1_relu.1} parent=5 // pred_region
      %s152 = ssub.s32 %s9, 1
      // Predicated region
      $region13: #{conv1x1_relu.1} parent=11 // pred_check
        %p153 = pneg %p82
      $region14: #{conv1x1_relu.1} parent=11 // pred_check_branch
        %155 = sbr.rel (%p153) target = $region16
      $region15: #{conv1x1_relu.1} parent=11 // pred_region
        %p156 = scmp.lt.s32.totalorder %s20, 0
        %s157 = scalar_select %p156, %s20, 0
        %s158 = smul.addr %s157, 8
        %s159 = scalar_lea.vmem %s1, %s158
      $region16: #{conv1x1_relu.1} parent=11 // pred_fallthru
        _
      // Predicated region
      $region17: #{conv1x1_relu.1} parent=11 // pred_check
        %p160 = pneg %p108
      $region18: #{conv1x1_relu.1} parent=11 // pred_check_branch
        %162 = sbr.rel (%p160) target = $region20
      $region19: #{conv1x1_relu.1} parent=11 // pred_region
        %p163 = scmp.lt.s32.totalorder %s20, 0
        %s164 = scalar_select %p163, %s20, 0
        %s165 = smul.addr %s164, 8
        %s166 = scalar_lea.vmem %s2, %s165
      $region20: #{conv1x1_relu.1} parent=11 // pred_fallthru
        _
    $region12: #{conv1x1_relu.1} parent=5 // pred_fallthru
      _
    %p167 = scmp.lt.s32.totalorder %s9, 2
    // Predicated region
    $region21: #{conv1x1_relu.1} parent=5 // pred_check
      %p168 = pneg %p167
    $region22: #{conv1x1_relu.1} parent=5 // pred_check_branch
      %170 = sbr.rel (%p168) target = $region24
    $region23: #{conv1x1_relu.1} parent=5 // pred_region
      // Predicated region
      $region25: #{conv1x1_relu.1} parent=23 // pred_check
        %p171 = pneg %p50
      $region26: #{conv1x1_relu.1} parent=23 // pred_check_branch
        %173 = sbr.rel (%p171) target = $region28
      $region27: #{conv1x1_relu.1} parent=23 // pred_region
        %s174 = smul.u32 2, %s18
        %p175 = scmp.lt.s32.totalorder %s16, 1
        %s176 = scalar_select %p175, %s16, 1
        %p177 = scmp.lt.s32.totalorder %s174, 1
        %s178 = scalar_select %p177, %s174, 1
        %s179 = smul.addr %s176, 2
        %s180 = sadd.s32 %s178, %s179
        %s181 = smul.addr %s180, 4
        %s182 = scalar_lea.vmem %s0, %s181
        %s183 = smul.u32 2, %s18
      $region28: #{conv1x1_relu.1} parent=23 // pred_fallthru
        _
    $region24: #{conv1x1_relu.1} parent=5 // pred_fallthru
      _
    %p184 = scmp.le.s32.totalorder 1, %s9
    %p185 = scmp.lt.s32.totalorder %s9, 3
    %p186 = pnand %p184, %p185
    %p187 = pneg %p186
    // Predicated region
    $region29: #{conv1x1_relu.1} parent=5 // pred_check
      _
    $region30: #{conv1x1_relu.1} parent=5 // pred_check_branch
      %189 = sbr.rel (%p186) target = $region32
    $region31: #{conv1x1_relu.1} parent=5 // pred_region
      %s190 = ssub.s32 %s9, 1
      %s191 = smul.u32 2, %s21
      %p192 = scmp.lt.s32.totalorder %s19, 1
      %s193 = scalar_select %p192, %s19, 1
      %p194 = scmp.lt.s32.totalorder %s191, 1
      %s195 = scalar_select %p194, %s191, 1
      %s196 = smul.addr %s193, 2
      %s197 = sadd.s32 %s195, %s196
      %s198 = smul.addr %s197, 4
      %s199 = scalar_lea.vmem %s0, %s198
      %p200 = pneg %p56
      %p201 = pneg %p53
      %p202 = scmp.lt.s32.totalorder %s20, 0
      %s203 = scalar_select %p202, %s20, 0
      %s204 = smul.addr %s203, 8
      %s205 = scalar_lea.vmem %s1, %s204
      %p206 = pneg %p82
      %p207 = pneg %p79
      %p208 = scmp.lt.s32.totalorder %s20, 0
      %s209 = scalar_select %p208, %s20, 0
      %s210 = smul.addr %s209, 8
      %s211 = scalar_lea.vmem %s2, %s210
      %p212 = pneg %p108
      %p213 = pneg %p105
      %p214 = pneg %p138
      %p215 = pneg %p135
      %s216 = smul.u32 2, %s21
      %p217 = scmp.lt.s32.totalorder %s19, 1
      %s218 = scalar_select %p217, %s19, 1
      %p219 = scmp.lt.s32.totalorder %s20, 0
      %s220 = scalar_select %p219, %s20, 0
      %p221 = scmp.lt.s32.totalorder %s216, 1
      %s222 = scalar_select %p221, %s216, 1
      %s223 = smul.addr %s220, 2
      %s224 = sadd.s32 %s222, %s223
      %s225 = smul.addr %s218, 2
      %s226 = sadd.s32 %s224, %s225
      %s227 = smul.addr %s226, 8
      %s228 = scalar_lea.vmem %s3, %s227
      %s229 = smul.u32 2, %s21
      %p230 = scmp.lt.s32.totalorder %s19, 1
      %s231 = scalar_select %p230, %s19, 1
      %p232 = scmp.lt.s32.totalorder %s229, 1
      %s233 = scalar_select %p232, %s229, 1
      %s234 = smul.addr %s231, 2
      %s235 = sadd.s32 %s233, %s234
      %s236 = smul.addr %s235, 4
      %s237 = scalar_lea.vmem %s0, %s236
      %s238 = smul.u32 2, %s21
      %p239 = scmp.lt.s32.totalorder %s20, 0
      %s240 = scalar_select %p239, %s20, 0
      %s241 = smul.addr %s240, 8
      %s242 = scalar_lea.vmem %s1, %s241
      %p243 = scmp.lt.s32.totalorder %s20, 0
      %s244 = scalar_select %p243, %s20, 0
      %s245 = smul.addr %s244, 8
      %s246 = scalar_lea.vmem %s2, %s245
      %s247 = smul.u32 2, %s21
      %p248 = scmp.lt.s32.totalorder %s19, 1
      %s249 = scalar_select %p248, %s19, 1
      %p250 = scmp.lt.s32.totalorder %s20, 0
      %s251 = scalar_select %p250, %s20, 0
      %p252 = scmp.lt.s32.totalorder %s247, 1
      %s253 = scalar_select %p252, %s247, 1
      %s254 = smul.addr %s251, 2
      %s255 = sadd.s32 %s253, %s254
      %s256 = smul.addr %s249, 2
      %s257 = sadd.s32 %s255, %s256
      %s258 = smul.addr %s257, 8
      %s259 = scalar_lea.vmem %s3, %s258
      %s260 = smul.u32 2, %s21
      %v261 = vld [vmem:[%s242] sm:$0xff]
      %v262 = vld [vmem:[%s237] sm:$0xff]
      %v263 = vld [vmem:[%s246] sm:$0xff]
      %265 = vset.pattern.permute.xlu0 0
      %266 = vperm.xlu0 %265, %v263
      %v267 = vpop.permute.xlu0 %266
      %v270 = vcombine.high %v262, %v262
      %vm271 = vcmask 31744
      %v273 = vsel %vm271, %v261, 0
      %vm275 = vcmask 1043456
      %v276 = vsel %vm275, %v262, 0
      %v278 = vsel %vm275, %v270, 0
      %280 = vmatprep.subr.mxu0 0.0
      %281 = vmatpush1.msra.mxu0 0.0
      %282 = vmatprep.subr.mxu0 0.0
      %283 = vmatpush1.msra.mxu0 0.0
      %284 = vmatprep.subr.mxu0 0.0
      %285 = vmatpush1.msra.mxu0 0.0
      %286 = vmatprep.subr.mxu0 0.0
      %287 = vmatpush1.msra.mxu0 0.0
      %288 = vmatprep.subr.mxu0 0.0
      %289 = vmatpush1.msra.mxu0 0.0
      %290 = vmatprep.subr.mxu0 0.0
      %291 = vmatpush1.msra.mxu0 0.0
      %292 = vmatprep.subr.mxu0 0.0
      %293 = vmatpush1.msra.mxu0 0.0
      %294 = vmatprep.subr.mxu0 0.0
      %295 = vmatpush1.msra.mxu0 0.0
      %296 = vmatprep.subr.mxu0 0.0
      %297 = vmatpush1.msra.mxu0 0.0
      %298 = vmatprep.subr.mxu0 0.0
      %299 = vmatpush1.msra.mxu0 0.0
      %300 = vmatprep.subr.mxu0 0.0
      %301 = vmatpush1.msra.mxu0 0.0
      %302 = vmatprep.subr.mxu0 0.0
      %303 = vmatpush1.msra.mxu0 0.0
      %304 = vmatprep.subr.mxu0 0.0
      %305 = vmatpush1.msra.mxu0 0.0
      %306 = vmatprep.subr.mxu0 0.0
      %307 = vmatpush1.msra.mxu0 0.0
      %308 = vmatprep.subr.mxu0 0.0
      %309 = vmatpush1.msra.mxu0 0.0
      %310 = vmatprep.subr.mxu0 %v278
      %311 = vmatpush1.msra.mxu0 %v276
      %312 = vmatprep.subr.mxu0 0.0
      %313 = vmatpush2.msra.mxu0 0.0
      %314 = vmatprep.subr.mxu0 0.0
      %315 = vmatpush2.msra.mxu0 0.0
      %316 = vmatprep.subr.mxu0 0.0
      %317 = vmatpush2.msra.mxu0 0.0
      %318 = vmatprep.subr.mxu0 0.0
      %319 = vmatpush2.msra.mxu0 0.0
      %320 = vmatprep.subr.mxu0 0.0
      %321 = vmatpush2.msra.mxu0 0.0
      %322 = vmatprep.subr.mxu0 0.0
      %323 = vmatpush2.msra.mxu0 0.0
      %324 = vmatprep.subr.mxu0 0.0
      %325 = vmatpush2.msra.mxu0 0.0
      %326 = vmatprep.subr.mxu0 0.0
      %327 = vmatpush2.msra.mxu0 0.0
      %328 = vmatprep.subr.mxu0 0.0
      %329 = vmatpush2.msra.mxu0 0.0
      %330 = vmatprep.subr.mxu0 0.0
      %331 = vmatpush2.msra.mxu0 0.0
      %332 = vmatprep.subr.mxu0 0.0
      %333 = vmatpush2.msra.mxu0 0.0
      %334 = vmatprep.subr.mxu0 0.0
      %335 = vmatpush2.msra.mxu0 0.0
      %336 = vmatprep.subr.mxu0 0.0
      %337 = vmatpush2.msra.mxu0 0.0
      %338 = vmatprep.subr.mxu0 0.0
      %339 = vmatpush2.msra.mxu0 0.0
      %340 = vmatprep.subr.mxu0 0.0
      %341 = vmatpush2.msra.mxu0 0.0
      %342 = vmatprep.subr.mxu0 0.0
      %343 = vmatpush2.msra.mxu0 0.0
      %344 = vmatprep.mubr.f32.mxu0 0.0
      %345 = vmatmul.mubr.f32.gmra.mxu0 %v273
      %v346 = vpop.f32.mrf.mxu0
      %v347 = vadd.f32 %v267, %v346
      %v348 = vpop.f32.mrf.mxu0
      %v349 = vadd.f32 %v267, %v348
      %350 = vdwg.mxu0
      %v351 = vmax.f32 %v347, 0.0
      %v352 = vmax.f32 %v349, 0.0
      %353 = vst [vmem:[%s259] sm:$0xff] %v351
      %354 = vst [vmem:[%s259 + $0x8] sm:$0xff] %v352
      %s355 = smul.u32 2, %s21
      %p356 = scmp.lt.s32.totalorder %s19, 1
      %s357 = scalar_select %p356, %s19, 1
      %p358 = scmp.lt.s32.totalorder %s20, 0
      %s359 = scalar_select %p358, %s20, 0
      %p360 = scmp.lt.s32.totalorder %s355, 1
      %s361 = scalar_select %p360, %s355, 1
      %s362 = smul.addr %s359, 2
      %s363 = sadd.s32 %s361, %s362
      %s364 = smul.addr %s357, 2
      %s365 = sadd.s32 %s363, %s364
      %s366 = smul.addr %s365, 8
      %s367 = scalar_lea.vmem %s3, %s366
      // Predicated region
      $region33: #{conv1x1_relu.1} parent=31 // pred_check
        %p368 = pneg %p135
      $region34: #{conv1x1_relu.1} parent=31 // pred_check_branch
        %370 = sbr.rel (%p368) target = $region36
      $region35: #{conv1x1_relu.1} parent=31 // pred_region
        %s371 = smul.u32 2, %s21
      $region36: #{conv1x1_relu.1} parent=31 // pred_fallthru
        _
    $region32: #{conv1x1_relu.1} parent=5 // pred_fallthru
      _
    %p372 = scmp.le.s32.totalorder 2, %s9
    // Predicated region
    $region37: #{conv1x1_relu.1} parent=5 // pred_check
      %p373 = pneg %p372
    $region38: #{conv1x1_relu.1} parent=5 // pred_check_branch
      %375 = sbr.rel (%p373) target = $region40
    $region39: #{conv1x1_relu.1} parent=5 // pred_region
      %s376 = ssub.s32 %s9, 2
      // Predicated region
      $region41: #{conv1x1_relu.1} parent=39 // pred_check
        %p377 = pneg %p141
      $region42: #{conv1x1_relu.1} parent=39 // pred_check_branch
        %379 = sbr.rel (%p377) target = $region44
      $region43: #{conv1x1_relu.1} parent=39 // pred_region
        %s380 = smul.u32 2, %s24
        %p381 = scmp.lt.s32.totalorder %s22, 1
        %s382 = scalar_select %p381, %s22, 1
        %p383 = scmp.lt.s32.totalorder %s23, 0
        %s384 = scalar_select %p383, %s23, 0
        %p385 = scmp.lt.s32.totalorder %s380, 1
        %s386 = scalar_select %p385, %s380, 1
        %s387 = smul.addr %s384, 2
        %s388 = sadd.s32 %s386, %s387
        %s389 = smul.addr %s382, 2
        %s390 = sadd.s32 %s388, %s389
        %s391 = smul.addr %s390, 8
        %s392 = scalar_lea.vmem %s3, %s391
      $region44: #{conv1x1_relu.1} parent=39 // pred_fallthru
        _
    $region40: #{conv1x1_relu.1} parent=5 // pred_fallthru
      _
  $region6: #{conv1x1_relu.1} parent=0 // loop_footer
    %s13 = sadd.s32 1, %s9
  $region7: #{conv1x1_relu.1} parent=0 // loop_footer_branch
    %8 = sbr.rel target = $region3
  $region8: #{conv1x1_relu.1} parent=0 // loop_exit
    _

</llo_original>
